<compile_context>
chip_gen: v7x
topology: tpu7x:2x2x1
jax: 0.10.0
libtpu: 0.0.40
codegen_flags: <defaults>
</compile_context>

<pallas_src>
import jax
import jax.numpy as jnp
from jax.experimental import pallas as pl
from jax.experimental.pallas import tpu as pltpu

HIDDEN = 256
LOG_STD_MIN = -20.0
LOG_STD_MAX = 2.0
EDGE = 0.003
LANE = 128
SUBLANE_BF16 = 16      # bf16 packs 16 rows per vreg sublane group
BIG = 1e30             # "no clamp" sentinel for mean / zero-pad columns


def _round_up(x, m):
    return (x + m - 1) // m * m


def _cdiv(a, b):
    return -(-a // b)


# --------------------------------------------------------------------------
# Kernel: one batch tile -> 3 MXU matmuls (layer1, layer2, fused heads)
# --------------------------------------------------------------------------
def _policy_kernel(x_ref, w1_ref, w2_ref, wh_ref, b12_ref, bh_ref, out_ref):
    # Cast the f32 state tile to bf16 in-kernel (no wrapper-side HBM pass).
    x = x_ref[...].astype(jnp.bfloat16)

    # layer 1: relu(x @ W1 + b1), f32 accumulation on the MXU
    h1 = jnp.dot(x, w1_ref[...], preferred_element_type=jnp.float32)
    h1 = jnp.maximum(h1 + b12_ref[0:1, :], 0.0).astype(jnp.bfloat16)

    # layer 2: relu(h1 @ W2 + b2)
    h2 = jnp.dot(h1, w2_ref[...], preferred_element_type=jnp.float32)
    h2 = jnp.maximum(h2 + b12_ref[1:2, :], 0.0).astype(jnp.bfloat16)

    # fused heads: [mean | log_std | zero-pad] in one lane-dense slab
    head = jnp.dot(h2, wh_ref[...], preferred_element_type=jnp.float32)
    # bias (row 0) + per-column clamp bounds (rows 1/2): (-20, 2) on log_std
    # columns, +-1e30 on mean / pad columns (i.e. no-op there).
    head = head + bh_ref[0:1, :]
    head = jnp.minimum(jnp.maximum(head, bh_ref[1:2, :]), bh_ref[2:3, :])

    out_ref[...] = head.astype(out_ref.dtype)   # bf16 slab, unmasked vst


# --------------------------------------------------------------------------
# Param packing (done once, outside the forward)
# --------------------------------------------------------------------------
def pack_params(params):
    """Cast to bf16, fuse heads into one lane-padded slab, bundle biases+bounds."""
    action_dim = params["wm"].shape[1]
    head_pad = _round_up(2 * action_dim, LANE)

    w1 = params["w1"].astype(jnp.bfloat16)
    w2 = params["w2"].astype(jnp.bfloat16)

    wh = jnp.zeros((HIDDEN, head_pad), jnp.float32)
    wh = wh.at[:, :action_dim].set(params["wm"])
    wh = wh.at[:, action_dim:2 * action_dim].set(params["ws"])
    wh = wh.astype(jnp.bfloat16)

    # (3, head_pad) f32: row 0 = fused head bias, rows 1/2 = clamp lo / hi
    bias = jnp.zeros((head_pad,), jnp.float32)
    bias = bias.at[:action_dim].set(params["bm"][0])
    bias = bias.at[action_dim:2 * action_dim].set(params["bs"][0])
    col = jnp.arange(head_pad)
    is_logstd = (col >= action_dim) & (col < 2 * action_dim)
    lo = jnp.where(is_logstd, LOG_STD_MIN, -BIG).astype(jnp.float32)
    hi = jnp.where(is_logstd, LOG_STD_MAX, BIG).astype(jnp.float32)
    bh = jnp.stack([bias, lo, hi], axis=0)

    b12 = jnp.concatenate([params["b1"], params["b2"]], axis=0)  # (2, 256) f32

    return {"w1": w1, "w2": w2, "wh": wh, "b12": b12, "bh": bh}


# --------------------------------------------------------------------------
# Forward wrapper
# --------------------------------------------------------------------------
def _pick_tile(batch, tile_b, min_split):
    """Batch tile: fewest grid steps that fit tile_b, >=2 steps for big batches
    (v7x dual-TC), rounded to the bf16 sublane multiple to keep padding small."""
    n_steps = max(_cdiv(batch, tile_b), 1)
    if batch >= min_split:
        n_steps = max(n_steps, 2)
    tb = _round_up(_cdiv(batch, n_steps), SUBLANE_BF16)
    pad_b = _round_up(batch, tb)
    return tb, pad_b


def policy_net_forward(state, packed, *, action_dim, tile_b=2048, min_split=256):
    """state: (B, state_dim) f32. Returns (mean, log_std), both (B, action_dim) f32."""
    B, S = state.shape
    head_pad = packed["wh"].shape[1]

    tb, pad_b = _pick_tile(B, tile_b, min_split)

    x = state
    if pad_b != B:
        x = jnp.pad(x, ((0, pad_b - B), (0, 0)))

    out = pl.pallas_call(
        _policy_kernel,
        out_shape=jax.ShapeDtypeStruct((pad_b, head_pad), jnp.bfloat16),
        grid=(pad_b // tb,),
        in_specs=[
            pl.BlockSpec((tb, S), lambda i: (i, 0)),            # activations: tiled, f32
            pl.BlockSpec((S, HIDDEN), lambda i: (0, 0)),        # weights: VMEM-resident
            pl.BlockSpec((HIDDEN, HIDDEN), lambda i: (0, 0)),
            pl.BlockSpec((HIDDEN, head_pad), lambda i: (0, 0)),
            pl.BlockSpec((2, HIDDEN), lambda i: (0, 0)),        # bundled hidden biases
            pl.BlockSpec((3, head_pad), lambda i: (0, 0)),      # head bias + clamp bounds
        ],
        out_specs=pl.BlockSpec((tb, head_pad), lambda i: (i, 0)),
        compiler_params=pltpu.CompilerParams(
            dimension_semantics=("parallel",)),
    )(x, packed["w1"], packed["w2"], packed["wh"], packed["b12"], packed["bh"])

    mean = out[:B, :action_dim].astype(jnp.float32)
    log_std = out[:B, action_dim:2 * action_dim].astype(jnp.float32)
    return mean, log_std


# --------------------------------------------------------------------------
# Init + pure-JAX reference (f32, un-fused) for correctness checking
# --------------------------------------------------------------------------
def init_policy_params(key, state_dim, action_dim, edge=EDGE):
    """Deterministic init mirroring the PyTorch module's __init__ (f32 master copy)."""
    ks = jax.random.split(key, 8)

    def torch_linear(kw, kb, fan_in, fan_out):
        bound = 1.0 / jnp.sqrt(jnp.float32(fan_in))
        w = jax.random.uniform(kw, (fan_in, fan_out), jnp.float32, -bound, bound)
        b = jax.random.uniform(kb, (1, fan_out), jnp.float32, -bound, bound)
        return w, b

    w1, b1 = torch_linear(ks[0], ks[1], state_dim, HIDDEN)
    w2, b2 = torch_linear(ks[2], ks[3], HIDDEN, HIDDEN)
    wm = jax.random.uniform(ks[4], (HIDDEN, action_dim), jnp.float32, -edge, edge)
    bm = jax.random.uniform(ks[5], (1, action_dim), jnp.float32, -edge, edge)
    ws = jax.random.uniform(ks[6], (HIDDEN, action_dim), jnp.float32, -edge, edge)
    bs = jax.random.uniform(ks[7], (1, action_dim), jnp.float32, -edge, edge)

    return {"w1": w1, "b1": b1, "w2": w2, "b2": b2,
            "wm": wm, "bm": bm, "ws": ws, "bs": bs}


def reference_forward(state, params):
    h1 = jax.nn.relu(state @ params["w1"] + params["b1"])
    h2 = jax.nn.relu(h1 @ params["w2"] + params["b2"])
    mean = h2 @ params["wm"] + params["bm"]
    log_std = jnp.clip(h2 @ params["ws"] + params["bs"], LOG_STD_MIN, LOG_STD_MAX)
    return mean, log_std


if __name__ == "__main__":
    key = jax.random.PRNGKey(0)
    k_param, k_state = jax.random.split(key)

    batch = 8
    state_dim = 16
    action_dim = 4

    params = init_policy_params(k_param, state_dim, action_dim)
    packed = pack_params(params)
    state = jax.random.normal(k_state, (batch, state_dim), jnp.float32)

    fwd = jax.jit(policy_net_forward,
                  static_argnames=("action_dim", "tile_b", "min_split"))
    mean, log_std = fwd(state, packed, action_dim=action_dim)
    jax.block_until_ready((mean, log_std))

    ref_mean, ref_log_std = reference_forward(state, params)
    assert mean.shape == (batch, action_dim)
    assert log_std.shape == (batch, action_dim)
    # bf16 weights/activations/output slab (f32 accumulation) -> relaxed tolerance
    assert jnp.allclose(mean, ref_mean, atol=1e-2, rtol=5e-2)
    assert jnp.allclose(log_std, ref_log_std, atol=1e-2, rtol=5e-2)
    assert bool(jnp.all(log_std >= LOG_STD_MIN)) and bool(jnp.all(log_std <= LOG_STD_MAX))

    print("KERNEL_OK")
</pallas_src>

<mosaic_0001>
module attributes {stable_mosaic.version = 11 : i64} {
  func.func @_policy_kernel(%arg0: i32, %arg1: memref<16x16xf32, #tpu.memory_space<vmem>>, %arg2: memref<16x256xbf16, #tpu.memory_space<vmem>>, %arg3: memref<256x256xbf16, #tpu.memory_space<vmem>>, %arg4: memref<256x128xbf16, #tpu.memory_space<vmem>>, %arg5: memref<2x256xf32, #tpu.memory_space<vmem>>, %arg6: memref<3x128xf32, #tpu.memory_space<vmem>>, %arg7: memref<16x128xbf16, #tpu.memory_space<vmem>>) attributes {dimension_semantics = [#tpu.dimension_semantics<parallel>], iteration_bounds = array<i64: 1>, scalar_prefetch = 0 : i64, scratch_operands = 0 : i64, tpu.core_type = #tpu.core_type<tc>, window_params = [{transform_indices = @transform_0, window_bounds = array<i64: 16, 16>}, {pipeline_mode = #tpu.pipeline_mode<synchronous>, transform_indices = @transform_1, window_bounds = array<i64: 16, 256>}, {pipeline_mode = #tpu.pipeline_mode<synchronous>, transform_indices = @transform_2, window_bounds = array<i64: 256, 256>}, {pipeline_mode = #tpu.pipeline_mode<synchronous>, transform_indices = @transform_3, window_bounds = array<i64: 256, 128>}, {pipeline_mode = #tpu.pipeline_mode<synchronous>, transform_indices = @transform_4, window_bounds = array<i64: 2, 256>}, {pipeline_mode = #tpu.pipeline_mode<synchronous>, transform_indices = @transform_5, window_bounds = array<i64: 3, 128>}, {transform_indices = @transform_6, window_bounds = array<i64: 16, 128>}]} {
    %c0 = arith.constant 0 : index
    %c0_0 = arith.constant 0 : index
    %0 = vector.load %arg1[%c0, %c0_0] : memref<16x16xf32, #tpu.memory_space<vmem>>, vector<16x16xf32>
    %1 = arith.truncf %0 : vector<16x16xf32> to vector<16x16xbf16>
    %c0_1 = arith.constant 0 : index
    %c0_2 = arith.constant 0 : index
    %2 = vector.load %arg2[%c0_1, %c0_2] : memref<16x256xbf16, #tpu.memory_space<vmem>>, vector<16x256xbf16>
    %cst = arith.constant dense<0.000000e+00> : vector<16x256xf32>
    %3 = tpu.matmul %1, %2, %cst {dimension_numbers = #tpu.dot_dimension_numbers<[1], [0], [0], [1], [0, 0, 1, 1], [], []>} : vector<16x16xbf16>, vector<16x256xbf16>, vector<16x256xf32> -> vector<16x256xf32>
    %c0_3 = arith.constant 0 : index
    %c0_4 = arith.constant 0 : index
    %4 = vector.load %arg5[%c0_3, %c0_4] : memref<2x256xf32, #tpu.memory_space<vmem>>, vector<1x256xf32>
    %5 = vector.broadcast %4 : vector<1x256xf32> to vector<16x256xf32>
    %6 = arith.addf %3, %5 : vector<16x256xf32>
    %cst_5 = arith.constant 0.000000e+00 : f32
    %7 = vector.broadcast %cst_5 : f32 to vector<16x256xf32>
    %8 = arith.maximumf %6, %7 : vector<16x256xf32>
    %9 = arith.truncf %8 : vector<16x256xf32> to vector<16x256xbf16>
    %c0_6 = arith.constant 0 : index
    %c0_7 = arith.constant 0 : index
    %10 = vector.load %arg3[%c0_6, %c0_7] : memref<256x256xbf16, #tpu.memory_space<vmem>>, vector<256x256xbf16>
    %cst_8 = arith.constant dense<0.000000e+00> : vector<16x256xf32>
    %11 = tpu.matmul %9, %10, %cst_8 {dimension_numbers = #tpu.dot_dimension_numbers<[1], [0], [0], [1], [0, 0, 1, 1], [], []>} : vector<16x256xbf16>, vector<256x256xbf16>, vector<16x256xf32> -> vector<16x256xf32>
    %c1 = arith.constant 1 : index
    %c0_9 = arith.constant 0 : index
    %12 = vector.load %arg5[%c1, %c0_9] : memref<2x256xf32, #tpu.memory_space<vmem>>, vector<1x256xf32>
    %13 = vector.broadcast %12 : vector<1x256xf32> to vector<16x256xf32>
    %14 = arith.addf %11, %13 : vector<16x256xf32>
    %cst_10 = arith.constant 0.000000e+00 : f32
    %15 = vector.broadcast %cst_10 : f32 to vector<16x256xf32>
    %16 = arith.maximumf %14, %15 : vector<16x256xf32>
    %17 = arith.truncf %16 : vector<16x256xf32> to vector<16x256xbf16>
    %c0_11 = arith.constant 0 : index
    %c0_12 = arith.constant 0 : index
    %18 = vector.load %arg4[%c0_11, %c0_12] : memref<256x128xbf16, #tpu.memory_space<vmem>>, vector<256x128xbf16>
    %cst_13 = arith.constant dense<0.000000e+00> : vector<16x128xf32>
    %19 = tpu.matmul %17, %18, %cst_13 {dimension_numbers = #tpu.dot_dimension_numbers<[1], [0], [0], [1], [0, 0, 1, 1], [], []>} : vector<16x256xbf16>, vector<256x128xbf16>, vector<16x128xf32> -> vector<16x128xf32>
    %c0_14 = arith.constant 0 : index
    %c0_15 = arith.constant 0 : index
    %20 = vector.load %arg6[%c0_14, %c0_15] : memref<3x128xf32, #tpu.memory_space<vmem>>, vector<1x128xf32>
    %21 = vector.broadcast %20 : vector<1x128xf32> to vector<16x128xf32>
    %22 = arith.addf %19, %21 : vector<16x128xf32>
    %c1_16 = arith.constant 1 : index
    %c0_17 = arith.constant 0 : index
    %23 = vector.load %arg6[%c1_16, %c0_17] : memref<3x128xf32, #tpu.memory_space<vmem>>, vector<1x128xf32>
    %24 = vector.broadcast %23 : vector<1x128xf32> to vector<16x128xf32>
    %25 = arith.maximumf %22, %24 : vector<16x128xf32>
    %c2 = arith.constant 2 : index
    %c0_18 = arith.constant 0 : index
    %26 = vector.load %arg6[%c2, %c0_18] : memref<3x128xf32, #tpu.memory_space<vmem>>, vector<1x128xf32>
    %27 = vector.broadcast %26 : vector<1x128xf32> to vector<16x128xf32>
    %28 = arith.minimumf %25, %27 : vector<16x128xf32>
    %29 = arith.truncf %28 : vector<16x128xf32> to vector<16x128xbf16>
    %c0_19 = arith.constant 0 : index
    %c0_20 = arith.constant 0 : index
    %30 = vector.load %arg7[%c0_19, %c0_20] : memref<16x128xbf16, #tpu.memory_space<vmem>>, vector<16x128xbf16>
    tpu.vector_store %arg7[%c0_19, %c0_20], %29 {strides = array<i32>} : memref<16x128xbf16, #tpu.memory_space<vmem>>, vector<16x128xbf16>,
    return
  }
  func.func @transform_0(%arg0: i32) -> (i32, i32) {
    %c0_i32 = arith.constant 0 : i32
    %c0_i32_0 = arith.constant 0 : i32
    return %arg0, %c0_i32 : i32, i32
  }
  func.func @transform_1(%arg0: i32) -> (i32, i32) {
    %c0_i32 = arith.constant 0 : i32
    %c0_i32_0 = arith.constant 0 : i32
    %c0_i32_1 = arith.constant 0 : i32
    return %c0_i32, %c0_i32_0 : i32, i32
  }
  func.func @transform_2(%arg0: i32) -> (i32, i32) {
    %c0_i32 = arith.constant 0 : i32
    %c0_i32_0 = arith.constant 0 : i32
    %c0_i32_1 = arith.constant 0 : i32
    return %c0_i32, %c0_i32_0 : i32, i32
  }
  func.func @transform_3(%arg0: i32) -> (i32, i32) {
    %c0_i32 = arith.constant 0 : i32
    %c0_i32_0 = arith.constant 0 : i32
    %c0_i32_1 = arith.constant 0 : i32
    return %c0_i32, %c0_i32_0 : i32, i32
  }
  func.func @transform_4(%arg0: i32) -> (i32, i32) {
    %c0_i32 = arith.constant 0 : i32
    %c0_i32_0 = arith.constant 0 : i32
    %c0_i32_1 = arith.constant 0 : i32
    return %c0_i32, %c0_i32_0 : i32, i32
  }
  func.func @transform_5(%arg0: i32) -> (i32, i32) {
    %c0_i32 = arith.constant 0 : i32
    %c0_i32_0 = arith.constant 0 : i32
    %c0_i32_1 = arith.constant 0 : i32
    return %c0_i32, %c0_i32_0 : i32, i32
  }
  func.func @transform_6(%arg0: i32) -> (i32, i32) {
    %c0_i32 = arith.constant 0 : i32
    %c0_i32_0 = arith.constant 0 : i32
    return %arg0, %c0_i32 : i32, i32
  }
}

</mosaic_0001>

<llo_original>
// kernel: policy_net_forward.1
$region0: #{policy_net_forward.1}
  #allocation0 [shape = 'u32[]', space=smem, size = 0x4, offset = 0x4, fixed_abs, tag = 'smem constant byte address 0x4 - core index']
  #allocation1 [shape = 'u32[144,128]{1,0:T(1,128)}', space=vmem, size = 0x12000, scoped, tag = 'internal scratch']
  %s0 = inlined_call_operand.vmem [shape: f32[16,16], index: 0, kind: input, shape index: {}]
  %s1 = inlined_call_operand.vmem [shape: bf16[16,256], index: 1, kind: input, shape index: {}]
  %s2 = inlined_call_operand.hbm [shape: bf16[256,256], index: 2, kind: input, shape index: {}]
  %s3 = inlined_call_operand.hbm [shape: bf16[256,128], index: 3, kind: input, shape index: {}]
  %s4 = inlined_call_operand.vmem [shape: f32[2,256], index: 4, kind: input, shape index: {}]
  %s5 = inlined_call_operand.vmem [shape: f32[3,128], index: 5, kind: input, shape index: {}]
  %s6 = inlined_call_operand.vmem [shape: bf16[16,128], index: 6, kind: output, shape index: {}]
  %s7 = sld [smem:[#allocation0]]
  $region42: #{policy_net_forward.1} parent=0
    _
  %s9 = ssub.s32 1, %s7
  %s10 = scalar_select 0, %s9, %s7
  $region1: #{policy_net_forward.1} parent=0
    #allocation2 [shape = 'u8[131072]{0}', space=vmem, size = 0x20000, scoped, tag = 'input window, operand 2, single buffered']
    #allocation3 [shape = 's32[1]{0}', space=sflag, size = 0x4, scoped, tag = 'scoped memory for policy_net_forward.1']
    #allocation4 [shape = 'u8[65536]{0}', space=vmem, size = 0x10000, scoped, tag = 'input window, operand 3, single buffered']
    #allocation5 [shape = 's32[1]{0}', space=sflag, size = 0x4, scoped, tag = 'scoped memory for policy_net_forward.1']
    %11 = vsyncpa [#allocation3], 0
    %12 = vsyncpa [#allocation5], 0
    // Predicated region
    $region2: #{policy_net_forward.1} parent=1 // pred_check
      _
    $region3: #{policy_net_forward.1} parent=1 // pred_check_branch
      %14 = sbr.rel (0) target = $region5
    $region4: #{policy_net_forward.1} parent=1 // pred_region
      _
    $region5: #{policy_net_forward.1} parent=1 // pred_fallthru
      _
    // Predicated region
    $region6: #{policy_net_forward.1} parent=1 // pred_check
      _
    $region7: #{policy_net_forward.1} parent=1 // pred_check_branch
      %16 = sbr.rel (0) target = $region9
    $region8: #{policy_net_forward.1} parent=1 // pred_region
      _
    $region9: #{policy_net_forward.1} parent=1 // pred_fallthru
      _
    // Predicated region
    $region10: #{policy_net_forward.1} parent=1 // pred_check
      _
    $region11: #{policy_net_forward.1} parent=1 // pred_check_branch
      %18 = sbr.rel (0) target = $region13
    $region12: #{policy_net_forward.1} parent=1 // pred_region
      %s20 = ssub.s32 4096, 4096
      %21 = vsyncadd [#allocation3], %s20
      %s22 = sshll.u32 [#allocation2], 4
      %s23 = int_to_ptr.vmem [resolvable:$true] %s22
      %28 = dma.hbm_to_vmem [thread:$0]  %s2, 4096, %s23, [#allocation3], 128, 128, 8
    $region13: #{policy_net_forward.1} parent=1 // pred_fallthru
      _
    // Predicated region
    $region14: #{policy_net_forward.1} parent=1 // pred_check
      _
    $region15: #{policy_net_forward.1} parent=1 // pred_check_branch
      %30 = sbr.rel (0) target = $region17
    $region16: #{policy_net_forward.1} parent=1 // pred_region
      %s32 = ssub.s32 2048, 2048
      %33 = vsyncadd [#allocation5], %s32
      %s34 = sshll.u32 [#allocation4], 4
      %s35 = int_to_ptr.vmem [resolvable:$true] %s34
      %40 = dma.hbm_to_vmem [thread:$0]  %s3, 2048, %s35, [#allocation5], 64, 64, 4
    $region17: #{policy_net_forward.1} parent=1 // pred_fallthru
      _
    // Predicated region
    $region18: #{policy_net_forward.1} parent=1 // pred_check
      _
    $region19: #{policy_net_forward.1} parent=1 // pred_check_branch
      %42 = sbr.rel (0) target = $region21
    $region20: #{policy_net_forward.1} parent=1 // pred_region
      _
    $region21: #{policy_net_forward.1} parent=1 // pred_fallthru
      _
    // Predicated region
    $region22: #{policy_net_forward.1} parent=1 // pred_check
      _
    $region23: #{policy_net_forward.1} parent=1 // pred_check_branch
      %44 = sbr.rel (0) target = $region25
    $region24: #{policy_net_forward.1} parent=1 // pred_region
      _
    $region25: #{policy_net_forward.1} parent=1 // pred_fallthru
      _
    // Predicated region
    $region26: #{policy_net_forward.1} parent=1 // pred_check
      _
    $region27: #{policy_net_forward.1} parent=1 // pred_check_branch
      %46 = sbr.rel (0) target = $region29
    $region28: #{policy_net_forward.1} parent=1 // pred_region
      %47 = dma.done [#allocation3], 4096
    $region29: #{policy_net_forward.1} parent=1 // pred_fallthru
      _
    // Predicated region
    $region30: #{policy_net_forward.1} parent=1 // pred_check
      _
    $region31: #{policy_net_forward.1} parent=1 // pred_check_branch
      %49 = sbr.rel (0) target = $region33
    $region32: #{policy_net_forward.1} parent=1 // pred_region
      %50 = dma.done [#allocation5], 2048
    $region33: #{policy_net_forward.1} parent=1 // pred_fallthru
      _
    %v52 = vld [vmem:[%s0] sm:$0xff]
    %v53 = vld [vmem:[%s0 + $0x8] sm:$0xff]
    %v54 = vpack.c.bf16 %v53, %v52
    %v55 = vld [vmem:[%s1] sm:$0xff]
    %v56 = vld [vmem:[%s1 + $0x8] sm:$0xff]
    %v57 = vld [vmem:[%s4] ss:$2 sm:$0x3]
    %v59 = vlaneseq
    %v60 = vshrl.u32 %v59, 7
    %v61 = vsub.s32 0, %v60
    %v62 = vrot.slane %v57, %v61
    %v63 = vlaneseq
    %v64 = vshrl.u32 %v63, 7
    %v65 = vsub.s32 1, %v64
    %v66 = vrot.slane %v57, %v65
    %v71 = vunpack.c.l.b16 %v55
    %v72 = vunpack.c.h.b16 %v55
    %v73 = vunpack.c.l.b16 %v56
    %v74 = vunpack.c.h.b16 %v56
    %v75 = vpack.c.b16 %v73, %v71
    %v76 = vpack.c.b16 %v74, %v72
    %vm79 = vcmask 130048
    %v81 = vsel %vm79, %v54, 0
    %83 = vmatprep.subr.bf16.mxu0 %v76
    %84 = vmatpush1.bf16.msra.mxu0 %v75
    %85 = vmatprep.subr.bf16.mxu0 0
    %86 = vmatpush1.bf16.msra.mxu0 0
    %87 = vmatprep.subr.bf16.mxu0 0
    %88 = vmatpush1.bf16.msra.mxu0 0
    %89 = vmatprep.subr.bf16.mxu0 0
    %90 = vmatpush1.bf16.msra.mxu0 0
    %91 = vmatprep.subr.bf16.mxu0 0
    %92 = vmatpush1.bf16.msra.mxu0 0
    %93 = vmatprep.subr.bf16.mxu0 0
    %94 = vmatpush1.bf16.msra.mxu0 0
    %95 = vmatprep.subr.bf16.mxu0 0
    %96 = vmatpush1.bf16.msra.mxu0 0
    %97 = vmatprep.subr.bf16.mxu0 0
    %98 = vmatpush1.bf16.msra.mxu0 0
    %99 = vmatprep.subr.bf16.mxu0 0
    %100 = vmatpush1.bf16.msra.mxu0 0
    %101 = vmatprep.subr.bf16.mxu0 0
    %102 = vmatpush1.bf16.msra.mxu0 0
    %103 = vmatprep.subr.bf16.mxu0 0
    %104 = vmatpush1.bf16.msra.mxu0 0
    %105 = vmatprep.subr.bf16.mxu0 0
    %106 = vmatpush1.bf16.msra.mxu0 0
    %107 = vmatprep.subr.bf16.mxu0 0
    %108 = vmatpush1.bf16.msra.mxu0 0
    %109 = vmatprep.subr.bf16.mxu0 0
    %110 = vmatpush1.bf16.msra.mxu0 0
    %111 = vmatprep.subr.bf16.mxu0 0
    %112 = vmatpush1.bf16.msra.mxu0 0
    %113 = vmatprep.subr.bf16.mxu0 0
    %114 = vmatpush1.bf16.msra.mxu0 0
    %115 = vmatprep.mubr.bf16.mxu0 0
    %116 = vmatmul.mubr.bf16.gmra.mrb[0].mxu0 %v81
    %v117 = vpop.f32.mrb[0].mxu0
    %v118 = vadd.f32 %v62, %v117
    %v119 = vpop.f32.mrb[0].mxu0
    %v120 = vadd.f32 %v66, %v119
    %v121 = vpop.f32.mrb[0].mxu0
    %v122 = vadd.f32 %v62, %v121
    %v123 = vpop.f32.mrb[0].mxu0
    %v124 = vadd.f32 %v66, %v123
    %125 = vdwg.mxu0
    %v126 = vmax.f32 %v118, 0.0
    %v127 = vmax.f32 %v120, 0.0
    %v128 = vmax.f32 %v122, 0.0
    %v129 = vmax.f32 %v124, 0.0
    %v130 = vpack.c.bf16 %v128, %v126
    %v131 = vpack.c.bf16 %v129, %v127
    %v132 = vld [vmem:[#allocation2] sm:$0xff]
    %v133 = vld [vmem:[#allocation2 + $0x8] sm:$0xff]
    %v134 = vld [vmem:[#allocation2 + $0x10] sm:$0xff]
    %v135 = vld [vmem:[#allocation2 + $0x18] sm:$0xff]
    %v136 = vld [vmem:[#allocation2 + $0x20] sm:$0xff]
    %v137 = vld [vmem:[#allocation2 + $0x28] sm:$0xff]
    %v138 = vld [vmem:[#allocation2 + $0x30] sm:$0xff]
    %v139 = vld [vmem:[#allocation2 + $0x38] sm:$0xff]
    %v140 = vld [vmem:[#allocation2 + $0x40] sm:$0xff]
    %v141 = vld [vmem:[#allocation2 + $0x48] sm:$0xff]
    %v142 = vld [vmem:[#allocation2 + $0x50] sm:$0xff]
    %v143 = vld [vmem:[#allocation2 + $0x58] sm:$0xff]
    %v144 = vld [vmem:[#allocation2 + $0x60] sm:$0xff]
    %v145 = vld [vmem:[#allocation2 + $0x68] sm:$0xff]
    %v146 = vld [vmem:[#allocation2 + $0x70] sm:$0xff]
    %v147 = vld [vmem:[#allocation2 + $0x78] sm:$0xff]
    %v148 = vld [vmem:[#allocation2 + $0x80] sm:$0xff]
    %v149 = vld [vmem:[#allocation2 + $0x88] sm:$0xff]
    %v150 = vld [vmem:[#allocation2 + $0x90] sm:$0xff]
    %v151 = vld [vmem:[#allocation2 + $0x98] sm:$0xff]
    %v152 = vld [vmem:[#allocation2 + $0xa0] sm:$0xff]
    %v153 = vld [vmem:[#allocation2 + $0xa8] sm:$0xff]
    %v154 = vld [vmem:[#allocation2 + $0xb0] sm:$0xff]
    %v155 = vld [vmem:[#allocation2 + $0xb8] sm:$0xff]
    %v156 = vld [vmem:[#allocation2 + $0xc0] sm:$0xff]
    %v157 = vld [vmem:[#allocation2 + $0xc8] sm:$0xff]
    %v158 = vld [vmem:[#allocation2 + $0xd0] sm:$0xff]
    %v159 = vld [vmem:[#allocation2 + $0xd8] sm:$0xff]
    %v160 = vld [vmem:[#allocation2 + $0xe0] sm:$0xff]
    %v161 = vld [vmem:[#allocation2 + $0xe8] sm:$0xff]
    %v162 = vld [vmem:[#allocation2 + $0xf0] sm:$0xff]
    %v163 = vld [vmem:[#allocation2 + $0xf8] sm:$0xff]
    %s164 = scalar_lea.vmem %s4, 1
    %v165 = vld [vmem:[%s164] ss:$2 sm:$0x3]
    %v167 = vlaneseq
    %v168 = vshrl.u32 %v167, 7
    %v169 = vsub.s32 0, %v168
    %v170 = vrot.slane %v165, %v169
    %v171 = vlaneseq
    %v172 = vshrl.u32 %v171, 7
    %v173 = vsub.s32 1, %v172
    %v174 = vrot.slane %v165, %v173
    %v209 = vunpack.c.l.b16 %v132
    %v210 = vunpack.c.h.b16 %v132
    %v211 = vunpack.c.l.b16 %v133
    %v212 = vunpack.c.h.b16 %v133
    %v213 = vunpack.c.l.b16 %v134
    %v214 = vunpack.c.h.b16 %v134
    %v215 = vunpack.c.l.b16 %v135
    %v216 = vunpack.c.h.b16 %v135
    %v217 = vunpack.c.l.b16 %v136
    %v218 = vunpack.c.h.b16 %v136
    %v219 = vunpack.c.l.b16 %v137
    %v220 = vunpack.c.h.b16 %v137
    %v221 = vunpack.c.l.b16 %v138
    %v222 = vunpack.c.h.b16 %v138
    %v223 = vunpack.c.l.b16 %v139
    %v224 = vunpack.c.h.b16 %v139
    %v225 = vunpack.c.l.b16 %v140
    %v226 = vunpack.c.h.b16 %v140
    %v227 = vunpack.c.l.b16 %v141
    %v228 = vunpack.c.h.b16 %v141
    %v229 = vunpack.c.l.b16 %v142
    %v230 = vunpack.c.h.b16 %v142
    %v231 = vunpack.c.l.b16 %v143
    %v232 = vunpack.c.h.b16 %v143
    %v233 = vunpack.c.l.b16 %v144
    %v234 = vunpack.c.h.b16 %v144
    %v235 = vunpack.c.l.b16 %v145
    %v236 = vunpack.c.h.b16 %v145
    %v237 = vunpack.c.l.b16 %v146
    %v238 = vunpack.c.h.b16 %v146
    %v239 = vunpack.c.l.b16 %v147
    %v240 = vunpack.c.h.b16 %v147
    %v241 = vunpack.c.l.b16 %v148
    %v242 = vunpack.c.h.b16 %v148
    %v243 = vunpack.c.l.b16 %v149
    %v244 = vunpack.c.h.b16 %v149
    %v245 = vunpack.c.l.b16 %v150
    %v246 = vunpack.c.h.b16 %v150
    %v247 = vunpack.c.l.b16 %v151
    %v248 = vunpack.c.h.b16 %v151
    %v249 = vunpack.c.l.b16 %v152
    %v250 = vunpack.c.h.b16 %v152
    %v251 = vunpack.c.l.b16 %v153
    %v252 = vunpack.c.h.b16 %v153
    %v253 = vunpack.c.l.b16 %v154
    %v254 = vunpack.c.h.b16 %v154
    %v255 = vunpack.c.l.b16 %v155
    %v256 = vunpack.c.h.b16 %v155
    %v257 = vunpack.c.l.b16 %v156
    %v258 = vunpack.c.h.b16 %v156
    %v259 = vunpack.c.l.b16 %v157
    %v260 = vunpack.c.h.b16 %v157
    %v261 = vunpack.c.l.b16 %v158
    %v262 = vunpack.c.h.b16 %v158
    %v263 = vunpack.c.l.b16 %v159
    %v264 = vunpack.c.h.b16 %v159
    %v265 = vunpack.c.l.b16 %v160
    %v266 = vunpack.c.h.b16 %v160
    %v267 = vunpack.c.l.b16 %v161
    %v268 = vunpack.c.h.b16 %v161
    %v269 = vunpack.c.l.b16 %v162
    %v270 = vunpack.c.h.b16 %v162
    %v271 = vunpack.c.l.b16 %v163
    %v272 = vunpack.c.h.b16 %v163
    %v273 = vpack.c.b16 %v211, %v209
    %v274 = vpack.c.b16 %v212, %v210
    %v275 = vpack.c.b16 %v215, %v213
    %v276 = vpack.c.b16 %v216, %v214
    %v277 = vpack.c.b16 %v219, %v217
    %v278 = vpack.c.b16 %v220, %v218
    %v279 = vpack.c.b16 %v223, %v221
    %v280 = vpack.c.b16 %v224, %v222
    %v281 = vpack.c.b16 %v227, %v225
    %v282 = vpack.c.b16 %v228, %v226
    %v283 = vpack.c.b16 %v231, %v229
    %v284 = vpack.c.b16 %v232, %v230
    %v285 = vpack.c.b16 %v235, %v233
    %v286 = vpack.c.b16 %v236, %v234
    %v287 = vpack.c.b16 %v239, %v237
    %v288 = vpack.c.b16 %v240, %v238
    %v289 = vpack.c.b16 %v243, %v241
    %v290 = vpack.c.b16 %v244, %v242
    %v291 = vpack.c.b16 %v247, %v245
    %v292 = vpack.c.b16 %v248, %v246
    %v293 = vpack.c.b16 %v251, %v249
    %v294 = vpack.c.b16 %v252, %v250
    %v295 = vpack.c.b16 %v255, %v253
    %v296 = vpack.c.b16 %v256, %v254
    %v297 = vpack.c.b16 %v259, %v257
    %v298 = vpack.c.b16 %v260, %v258
    %v299 = vpack.c.b16 %v263, %v261
    %v300 = vpack.c.b16 %v264, %v262
    %v301 = vpack.c.b16 %v267, %v265
    %v302 = vpack.c.b16 %v268, %v266
    %v303 = vpack.c.b16 %v271, %v269
    %v304 = vpack.c.b16 %v272, %v270
    %337 = vmatprep.subr.bf16.mxu0 %v274
    %338 = vmatpush1.bf16.msra.mxu0 %v273
    %339 = vmatprep.subr.bf16.mxu0 %v276
    %340 = vmatpush1.bf16.msra.mxu0 %v275
    %341 = vmatprep.subr.bf16.mxu0 %v278
    %342 = vmatpush1.bf16.msra.mxu0 %v277
    %343 = vmatprep.subr.bf16.mxu0 %v280
    %344 = vmatpush1.bf16.msra.mxu0 %v279
    %345 = vmatprep.subr.bf16.mxu0 %v282
    %346 = vmatpush1.bf16.msra.mxu0 %v281
    %347 = vmatprep.subr.bf16.mxu0 %v284
    %348 = vmatpush1.bf16.msra.mxu0 %v283
    %349 = vmatprep.subr.bf16.mxu0 %v286
    %350 = vmatpush1.bf16.msra.mxu0 %v285
    %351 = vmatprep.subr.bf16.mxu0 %v288
    %352 = vmatpush1.bf16.msra.mxu0 %v287
    %353 = vmatprep.subr.bf16.mxu0 %v290
    %354 = vmatpush1.bf16.msra.mxu0 %v289
    %355 = vmatprep.subr.bf16.mxu0 %v292
    %356 = vmatpush1.bf16.msra.mxu0 %v291
    %357 = vmatprep.subr.bf16.mxu0 %v294
    %358 = vmatpush1.bf16.msra.mxu0 %v293
    %359 = vmatprep.subr.bf16.mxu0 %v296
    %360 = vmatpush1.bf16.msra.mxu0 %v295
    %361 = vmatprep.subr.bf16.mxu0 %v298
    %362 = vmatpush1.bf16.msra.mxu0 %v297
    %363 = vmatprep.subr.bf16.mxu0 %v300
    %364 = vmatpush1.bf16.msra.mxu0 %v299
    %365 = vmatprep.subr.bf16.mxu0 %v302
    %366 = vmatpush1.bf16.msra.mxu0 %v301
    %367 = vmatprep.subr.bf16.mxu0 %v304
    %368 = vmatpush1.bf16.msra.mxu0 %v303
    %369 = vmatprep.mubr.bf16.mxu0 %v131
    %370 = vmatmul.mubr.bf16.gmra.mrb[0].mxu0 %v130
    %v371 = vpop.f32.mrb[0].mxu0
    %v372 = vadd.f32 %v170, %v371
    %v373 = vpop.f32.mrb[0].mxu0
    %v374 = vadd.f32 %v174, %v373
    %v375 = vpop.f32.mrb[0].mxu0
    %v376 = vadd.f32 %v170, %v375
    %v377 = vpop.f32.mrb[0].mxu0
    %v378 = vadd.f32 %v174, %v377
    %379 = vdwg.mxu0
    %v380 = vmax.f32 %v372, 0.0
    %v381 = vmax.f32 %v374, 0.0
    %v382 = vmax.f32 %v376, 0.0
    %v383 = vmax.f32 %v378, 0.0
    %v384 = vpack.c.bf16 %v382, %v380
    %v385 = vpack.c.bf16 %v383, %v381
    %v386 = vld [vmem:[#allocation4] sm:$0xf]
    %v387 = vld [vmem:[#allocation4 + $0x4] sm:$0xf]
    %v388 = vld [vmem:[#allocation4 + $0x8] sm:$0xf]
    %v389 = vld [vmem:[#allocation4 + $0xc] sm:$0xf]
    %v390 = vld [vmem:[#allocation4 + $0x10] sm:$0xf]
    %v391 = vld [vmem:[#allocation4 + $0x14] sm:$0xf]
    %v392 = vld [vmem:[#allocation4 + $0x18] sm:$0xf]
    %v393 = vld [vmem:[#allocation4 + $0x1c] sm:$0xf]
    %v394 = vld [vmem:[#allocation4 + $0x20] sm:$0xf]
    %v395 = vld [vmem:[#allocation4 + $0x24] sm:$0xf]
    %v396 = vld [vmem:[#allocation4 + $0x28] sm:$0xf]
    %v397 = vld [vmem:[#allocation4 + $0x2c] sm:$0xf]
    %v398 = vld [vmem:[#allocation4 + $0x30] sm:$0xf]
    %v399 = vld [vmem:[#allocation4 + $0x34] sm:$0xf]
    %v400 = vld [vmem:[#allocation4 + $0x38] sm:$0xf]
    %v401 = vld [vmem:[#allocation4 + $0x3c] sm:$0xf]
    %v402 = vld [vmem:[#allocation4 + $0x40] sm:$0xf]
    %v403 = vld [vmem:[#allocation4 + $0x44] sm:$0xf]
    %v404 = vld [vmem:[#allocation4 + $0x48] sm:$0xf]
    %v405 = vld [vmem:[#allocation4 + $0x4c] sm:$0xf]
    %v406 = vld [vmem:[#allocation4 + $0x50] sm:$0xf]
    %v407 = vld [vmem:[#allocation4 + $0x54] sm:$0xf]
    %v408 = vld [vmem:[#allocation4 + $0x58] sm:$0xf]
    %v409 = vld [vmem:[#allocation4 + $0x5c] sm:$0xf]
    %v410 = vld [vmem:[#allocation4 + $0x60] sm:$0xf]
    %v411 = vld [vmem:[#allocation4 + $0x64] sm:$0xf]
    %v412 = vld [vmem:[#allocation4 + $0x68] sm:$0xf]
    %v413 = vld [vmem:[#allocation4 + $0x6c] sm:$0xf]
    %v414 = vld [vmem:[#allocation4 + $0x70] sm:$0xf]
    %v415 = vld [vmem:[#allocation4 + $0x74] sm:$0xf]
    %v416 = vld [vmem:[#allocation4 + $0x78] sm:$0xf]
    %v417 = vld [vmem:[#allocation4 + $0x7c] sm:$0xf]
    %v418 = vld [vmem:[%s5] sm:$0x1]
    %v419 = vlaneseq
    %v420 = vshrl.u32 %v419, 7
    %v421 = vsub.s32 0, %v420
    %v422 = vrot.slane %v418, %v421
    %v455 = vunpack.c.l.b16 %v386
    %v456 = vunpack.c.l.b16 %v387
    %v457 = vunpack.c.l.b16 %v388
    %v458 = vunpack.c.l.b16 %v389
    %v459 = vunpack.c.l.b16 %v390
    %v460 = vunpack.c.l.b16 %v391
    %v461 = vunpack.c.l.b16 %v392
    %v462 = vunpack.c.l.b16 %v393
    %v463 = vunpack.c.l.b16 %v394
    %v464 = vunpack.c.l.b16 %v395
    %v465 = vunpack.c.l.b16 %v396
    %v466 = vunpack.c.l.b16 %v397
    %v467 = vunpack.c.l.b16 %v398
    %v468 = vunpack.c.l.b16 %v399
    %v469 = vunpack.c.l.b16 %v400
    %v470 = vunpack.c.l.b16 %v401
    %v471 = vunpack.c.l.b16 %v402
    %v472 = vunpack.c.l.b16 %v403
    %v473 = vunpack.c.l.b16 %v404
    %v474 = vunpack.c.l.b16 %v405
    %v475 = vunpack.c.l.b16 %v406
    %v476 = vunpack.c.l.b16 %v407
    %v477 = vunpack.c.l.b16 %v408
    %v478 = vunpack.c.l.b16 %v409
    %v479 = vunpack.c.l.b16 %v410
    %v480 = vunpack.c.l.b16 %v411
    %v481 = vunpack.c.l.b16 %v412
    %v482 = vunpack.c.l.b16 %v413
    %v483 = vunpack.c.l.b16 %v414
    %v484 = vunpack.c.l.b16 %v415
    %v485 = vunpack.c.l.b16 %v416
    %v486 = vunpack.c.l.b16 %v417
    %v487 = vpack.c.b16 %v456, %v455
    %v488 = vpack.c.b16 %v458, %v457
    %v489 = vpack.c.b16 %v460, %v459
    %v490 = vpack.c.b16 %v462, %v461
    %v491 = vpack.c.b16 %v464, %v463
    %v492 = vpack.c.b16 %v466, %v465
    %v493 = vpack.c.b16 %v468, %v467
    %v494 = vpack.c.b16 %v470, %v469
    %v495 = vpack.c.b16 %v472, %v471
    %v496 = vpack.c.b16 %v474, %v473
    %v497 = vpack.c.b16 %v476, %v475
    %v498 = vpack.c.b16 %v478, %v477
    %v499 = vpack.c.b16 %v480, %v479
    %v500 = vpack.c.b16 %v482, %v481
    %v501 = vpack.c.b16 %v484, %v483
    %v502 = vpack.c.b16 %v486, %v485
    %519 = vmatprep.subr.bf16.mxu0 0
    %520 = vmatpush1.bf16.msra.mxu0 %v487
    %521 = vmatprep.subr.bf16.mxu0 0
    %522 = vmatpush1.bf16.msra.mxu0 %v488
    %523 = vmatprep.subr.bf16.mxu0 0
    %524 = vmatpush1.bf16.msra.mxu0 %v489
    %525 = vmatprep.subr.bf16.mxu0 0
    %526 = vmatpush1.bf16.msra.mxu0 %v490
    %527 = vmatprep.subr.bf16.mxu0 0
    %528 = vmatpush1.bf16.msra.mxu0 %v491
    %529 = vmatprep.subr.bf16.mxu0 0
    %530 = vmatpush1.bf16.msra.mxu0 %v492
    %531 = vmatprep.subr.bf16.mxu0 0
    %532 = vmatpush1.bf16.msra.mxu0 %v493
    %533 = vmatprep.subr.bf16.mxu0 0
    %534 = vmatpush1.bf16.msra.mxu0 %v494
    %535 = vmatprep.subr.bf16.mxu0 0
    %536 = vmatpush1.bf16.msra.mxu0 %v495
    %537 = vmatprep.subr.bf16.mxu0 0
    %538 = vmatpush1.bf16.msra.mxu0 %v496
    %539 = vmatprep.subr.bf16.mxu0 0
    %540 = vmatpush1.bf16.msra.mxu0 %v497
    %541 = vmatprep.subr.bf16.mxu0 0
    %542 = vmatpush1.bf16.msra.mxu0 %v498
    %543 = vmatprep.subr.bf16.mxu0 0
    %544 = vmatpush1.bf16.msra.mxu0 %v499
    %545 = vmatprep.subr.bf16.mxu0 0
    %546 = vmatpush1.bf16.msra.mxu0 %v500
    %547 = vmatprep.subr.bf16.mxu0 0
    %548 = vmatpush1.bf16.msra.mxu0 %v501
    %549 = vmatprep.subr.bf16.mxu0 0
    %550 = vmatpush1.bf16.msra.mxu0 %v502
    %551 = vmatprep.mubr.bf16.mxu0 %v385
    %552 = vmatmul.mubr.bf16.gmra.mrb[0].mxu0 %v384
    %v553 = vpop.f32.mrb[0].mxu0
    %v554 = vadd.f32 %v422, %v553
    %v555 = vpop.f32.mrb[0].mxu0
    %v556 = vpop.f32.mrb[0].mxu0
    %v557 = vadd.f32 %v422, %v556
    %v558 = vpop.f32.mrb[0].mxu0
    %559 = vdwg.mxu0
    %v560 = vld [vmem:[%s5 + $0x1] sm:$0x1]
    %v561 = vlaneseq
    %v562 = vshrl.u32 %v561, 7
    %v563 = vsub.s32 0, %v562
    %v564 = vrot.slane %v560, %v563
    %v565 = vmax.f32 %v554, %v564
    %v566 = vmax.f32 %v557, %v564
    %v567 = vld [vmem:[%s5 + $0x2] sm:$0x1]
    %v568 = vlaneseq
    %v569 = vshrl.u32 %v568, 7
    %v570 = vsub.s32 0, %v569
    %v571 = vrot.slane %v567, %v570
    %v572 = vmin.f32 %v565, %v571
    %v573 = vmin.f32 %v566, %v571
    %v574 = vpack.c.bf16 %v573, %v572
    %v576 = vunpack.c.l.b16 %v574
    %v577 = vunpack.c.h.b16 %v574
    %v578 = vpack.c.b16 %v576, %v576
    %v579 = vpack.c.b16 %v577, %v577
    %582 = vst [vmem:[%s6] sm:$0xf] %v578
    %583 = vst [vmem:[%s6 + $0x4] sm:$0xf] %v579
    // Predicated region
    $region34: #{policy_net_forward.1} parent=1 // pred_check
      _
    $region35: #{policy_net_forward.1} parent=1 // pred_check_branch
      %585 = sbr.rel (0) target = $region37
    $region36: #{policy_net_forward.1} parent=1 // pred_region
      _
    $region37: #{policy_net_forward.1} parent=1 // pred_fallthru
      _
    // Predicated region
    $region38: #{policy_net_forward.1} parent=1 // pred_check
      _
    $region39: #{policy_net_forward.1} parent=1 // pred_check_branch
      %587 = sbr.rel (0) target = $region41
    $region40: #{policy_net_forward.1} parent=1 // pred_region
      _
    $region41: #{policy_net_forward.1} parent=1 // pred_fallthru
      _
    %588 = vsyncpa [#allocation3], 1
    %589 = vsyncpa [#allocation5], 1

</llo_original>
